<compile_context>
chip_gen: v6e
topology: v6e:2x2x1
jax: 0.10.0
libtpu: 0.0.40
codegen_flags: <defaults>
</compile_context>

<pallas_src>
import functools

import jax
import jax.numpy as jnp
from jax.experimental import pallas as pl
from jax.experimental.pallas import tpu as pltpu


def _round_up(n, m):
    return ((n + m - 1) // m) * m


def _keyvalue_kernel(x_ref, wf_ref, key_ref, val_ref, *, H, W, N_p, ck, bpp,
                     compute_dtype):
    # x_ref  : (bpp, Cin_p, N_p + 2*(W+1))  images, channels-first, flat spatial,
    #                                        zero-padded so every tap slice is in-bounds
    # wf_ref : (Cout, 9*Cin_p + 8)           fused Key+Value weights, (kh,kw,cin)-minor,
    #                                        last 8 columns = [bias, zeros] (bias fold)
    # key_ref: (bpp, Ck, N_p)                Key output (lane-dense)
    # val_ref: (bpp, Cv, N_p)                Value output (lane-dense)
    pad = W + 1

    # Boundary-validity masks on the flattened output index n = h*W + w.
    # Shared by all images in this grid step.
    idx = jax.lax.broadcasted_iota(jnp.int32, (1, N_p), 1)
    col = idx % W
    ok = {
        (-1, 0): idx >= W,                 # dh == -1: not in the top row
        (+1, 0): idx < (H - 1) * W,        # dh == +1: not in the bottom row
        (0, -1): col >= 1,                 # dw == -1: not in the left column
        (0, +1): col <= W - 2,             # dw == +1: not in the right column
    }

    # Bias fold: a single ones-row multiplies the bias column of wf; 7 zero
    # rows keep the contraction length a whole sublane tile.
    bias_rows = jnp.concatenate(
        [jnp.ones((1, N_p), compute_dtype), jnp.zeros((7, N_p), compute_dtype)],
        axis=0)

    wf = wf_ref[...]

    for b in range(bpp):                                   # static unroll (bpp small)
        x = x_ref[b]                                       # (Cin_p, N_p + 2*pad)

        # On-chip im2col: 9 shifted, boundary-masked copies stacked along the
        # contraction axis.  Each chunk is a static lane slice of the padded
        # flat image (x[ci, n + dh*W + dw]); out-of-image taps are zeroed.
        chunks = []
        for kh in range(3):
            for kw in range(3):
                dh, dw = kh - 1, kw - 1
                s = pad + dh * W + dw                      # always >= 0
                chunk = x[:, s:s + N_p]                    # (Cin_p, N_p)
                mask = None
                for key in ((dh, 0), (0, dw)):
                    m = ok.get(key)
                    if m is not None:
                        mask = m if mask is None else (mask & m)
                if mask is not None:
                    chunk = jnp.where(mask, chunk, 0.0)
                chunks.append(chunk.astype(compute_dtype))
        slab = jnp.concatenate(chunks + [bias_rows], axis=0)  # (9*Cin_p + 8, N_p)

        # Single fused matmul for Key + Value (+ bias), f32 accumulation.
        acc = jnp.dot(wf, slab, preferred_element_type=jnp.float32)

        # Split stores: ck / cv are multiples of 8 -> sublane-aligned, and the
        # last dim N_p is a multiple of 128 -> unmasked lane-dense stores.
        key_ref[b] = acc[:ck].astype(key_ref.dtype)
        val_ref[b] = acc[ck:].astype(val_ref.dtype)


def prepare_keyvalue_params(wk_oihw, bk, wv_oihw, bv, *,
                            compute_dtype=jnp.float32):
    """One-time (per model) weight prep: fuse Key+Value, pad channels, fold bias."""
    ck, cin = int(wk_oihw.shape[0]), int(wk_oihw.shape[1])
    cv = int(wv_oihw.shape[0])
    cout = ck + cv
    cin_p = _round_up(cin, 8)                 # sublane-aligned channel padding

    w = jnp.concatenate([wk_oihw, wv_oihw], axis=0)             # (Cout, Cin, 3, 3)
    w = jnp.pad(w, ((0, 0), (0, cin_p - cin), (0, 0), (0, 0)))  # zero-weight channels
    wf = jnp.transpose(w, (0, 2, 3, 1)).reshape(cout, 9 * cin_p)  # (kh,kw,cin)-minor

    bias = jnp.concatenate([bk, bv]).reshape(cout, 1)
    bias_cols = jnp.concatenate([bias, jnp.zeros((cout, 7), bias.dtype)], axis=1)
    wf = jnp.concatenate([wf, bias_cols], axis=1).astype(compute_dtype)

    return {"wf": wf, "ck": ck, "cv": cv, "cin": cin, "cin_p": cin_p}


@functools.partial(jax.jit,
                   static_argnames=("ck", "cv", "cin_p", "batch_per_step",
                                    "compute_dtype"))
def keyvalue_forward(x_nchw, wf, *, ck, cv, cin_p, batch_per_step=1,
                     compute_dtype=jnp.float32):
    """KeyValue forward: [Conv2d_3x3_pad1(x; Key), Conv2d_3x3_pad1(x; Value)].

    x_nchw : (B, Cin, H, W);  wf: fused weights from prepare_keyvalue_params.
    batch_per_step=1 -> one image per grid step ("parallel": both v7x cores);
    batch_per_step=B -> single grid step (best on single-TC v5e/v6e).
    """
    B, cin, H, W = x_nchw.shape
    N = H * W
    N_p = _round_up(N, 128)                  # keep output stores lane-dense
    pad = W + 1
    n_ext = N_p + 2 * pad
    cout = ck + cv
    bpp = batch_per_step
    assert B % bpp == 0, "batch_per_step must divide the batch size"

    # Layout plumbing only (no conv compute): NCHW -> flat spatial (free
    # reshape), zero-pad channels to cin_p and the flat axis so every 3x3 tap
    # is a static in-bounds lane slice inside the kernel.
    # TODO(synk): at production Cin/H*W, fuse this pad into the kernel
    # (memory_space=pl.ANY + clamped tap slices) to keep HBM input traffic 1x.
    x_flat = x_nchw.reshape(B, cin, N)
    x_ext = jnp.pad(x_flat, ((0, 0), (0, cin_p - cin), (pad, pad + (N_p - N))))

    key, val = pl.pallas_call(
        functools.partial(_keyvalue_kernel, H=H, W=W, N_p=N_p, ck=ck, bpp=bpp,
                          compute_dtype=compute_dtype),
        out_shape=(jax.ShapeDtypeStruct((B, ck, N_p), x_nchw.dtype),
                   jax.ShapeDtypeStruct((B, cv, N_p), x_nchw.dtype)),
        grid_spec=pltpu.PrefetchScalarGridSpec(
            num_scalar_prefetch=0,
            grid=(B // bpp,),
            in_specs=[
                pl.BlockSpec((bpp, cin_p, n_ext), lambda b: (b, 0, 0)),
                pl.BlockSpec((cout, 9 * cin_p + 8), lambda b: (0, 0)),
            ],
            out_specs=[
                pl.BlockSpec((bpp, ck, N_p), lambda b: (b, 0, 0)),
                pl.BlockSpec((bpp, cv, N_p), lambda b: (b, 0, 0)),
            ],
        ),
        compiler_params=pltpu.CompilerParams(
            dimension_semantics=("parallel",)),
    )(x_ext, wf)

    if N_p != N:                              # only for odd feature-map sizes
        key = key[:, :, :N]
        val = val[:, :, :N]
    return [key.reshape(B, ck, H, W), val.reshape(B, cv, H, W)]


def _reference_conv(x_nchw, w_oihw, b):
    y = jax.lax.conv_general_dilated(
        x_nchw, w_oihw, window_strides=(1, 1), padding=((1, 1), (1, 1)),
        dimension_numbers=("NCHW", "OIHW", "NCHW"))
    return y + b.reshape(1, -1, 1, 1)


if __name__ == "__main__":
    # Small shapes consistent with the module: indim=4, keydim=8, valdim=16.
    B, CIN, H, W = 2, 4, 16, 16
    KEYDIM, VALDIM = 8, 16

    key0 = jax.random.PRNGKey(0)
    k1, k2, k3, k4, k5 = jax.random.split(key0, 5)

    x = jax.random.normal(k1, (B, CIN, H, W), dtype=jnp.float32)
    # Deterministic parameter init (synthetic; mimics Conv2d parameter shapes).
    fan_in = CIN * 3 * 3
    bound = 1.0 / (fan_in ** 0.5)
    wk = jax.random.uniform(k2, (KEYDIM, CIN, 3, 3), jnp.float32, -bound, bound)
    bk = jax.random.uniform(k3, (KEYDIM,), jnp.float32, -bound, bound)
    wv = jax.random.uniform(k4, (VALDIM, CIN, 3, 3), jnp.float32, -bound, bound)
    bv = jax.random.uniform(k5, (VALDIM,), jnp.float32, -bound, bound)

    # Weight fusion is done ONCE (hoisted out of the forward path).
    params = prepare_keyvalue_params(wk, bk, wv, bv)
    jax.block_until_ready(params["wf"])

    # Path 1: one image per grid step (2 parallel steps -> both v7x TCs).
    key_out, val_out = keyvalue_forward(
        x, params["wf"], ck=params["ck"], cv=params["cv"], cin_p=params["cin_p"],
        batch_per_step=1)
    jax.block_until_ready(key_out)
    jax.block_until_ready(val_out)

    # Path 2: whole batch in one grid step (best on single-TC v5e/v6e).
    key_out1, val_out1 = keyvalue_forward(
        x, params["wf"], ck=params["ck"], cv=params["cv"], cin_p=params["cin_p"],
        batch_per_step=B)
    jax.block_until_ready(key_out1)
    jax.block_until_ready(val_out1)

    # Correctness check against XLA's conv.
    key_ref = _reference_conv(x, wk, bk)
    val_ref = _reference_conv(x, wv, bv)
    assert key_out.shape == (B, KEYDIM, H, W)
    assert val_out.shape == (B, VALDIM, H, W)
    for ko, vo in ((key_out, val_out), (key_out1, val_out1)):
        assert jnp.allclose(ko, key_ref, atol=1e-4, rtol=1e-4)
        assert jnp.allclose(vo, val_ref, atol=1e-4, rtol=1e-4)

    print("KERNEL_OK")
</pallas_src>

<mosaic_0001>
module attributes {stable_mosaic.version = 11 : i64} {
  func.func @_keyvalue_kernel(%arg0: i32, %arg1: memref<1x8x290xf32, #tpu.memory_space<vmem>>, %arg2: memref<24x80xf32, #tpu.memory_space<vmem>>, %arg3: memref<1x8x256xf32, #tpu.memory_space<vmem>>, %arg4: memref<1x16x256xf32, #tpu.memory_space<vmem>>) attributes {dimension_semantics = [#tpu.dimension_semantics<parallel>], iteration_bounds = array<i64: 2>, scalar_prefetch = 0 : i64, scratch_operands = 0 : i64, tpu.core_type = #tpu.core_type<tc>, window_params = [{transform_indices = @transform_0, window_bounds = array<i64: 1, 8, 290>}, {pipeline_mode = #tpu.pipeline_mode<synchronous>, transform_indices = @transform_1, window_bounds = array<i64: 24, 80>}, {transform_indices = @transform_2, window_bounds = array<i64: 1, 8, 256>}, {transform_indices = @transform_3, window_bounds = array<i64: 1, 16, 256>}]} {
    %0 = tpu.iota {dimensions = array<i32: 1>} : vector<1x256xi32>
    %c16_i32 = arith.constant 16 : i32
    %c0_i32 = arith.constant 0 : i32
    %1 = arith.cmpi eq, %c16_i32, %c0_i32 : i32
    %c1_i32 = arith.constant 1 : i32
    %2 = arith.select %1, %c1_i32, %c16_i32 : i32
    %3 = vector.broadcast %2 : i32 to vector<1x256xi32>
    %4 = arith.remsi %0, %3 : vector<1x256xi32>
    %c0_i32_0 = arith.constant 0 : i32
    %5 = vector.broadcast %c0_i32_0 : i32 to vector<1x256xi32>
    %6 = arith.cmpi ne, %4, %5 : vector<1x256xi32>
    %c0_i32_1 = arith.constant 0 : i32
    %7 = vector.broadcast %c0_i32_1 : i32 to vector<1x256xi32>
    %8 = arith.cmpi slt, %4, %7 : vector<1x256xi32>
    %c0_i32_2 = arith.constant 0 : i32
    %9 = arith.cmpi slt, %2, %c0_i32_2 : i32
    %10 = vector.broadcast %9 : i1 to vector<1x256xi1>
    %11 = vector.broadcast %10 : vector<1x256xi1> to vector<1x256xi1>
    %12 = arith.xori %8, %11 : vector<1x256xi1>
    %13 = arith.andi %12, %6 : vector<1x256xi1>
    %14 = vector.broadcast %2 : i32 to vector<1x256xi32>
    %15 = arith.addi %4, %14 : vector<1x256xi32>
    %16 = arith.select %13, %15, %4 : vector<1x256xi1>, vector<1x256xi32>
    %c16_i32_3 = arith.constant 16 : i32
    %17 = vector.broadcast %c16_i32_3 : i32 to vector<1x256xi32>
    %18 = arith.cmpi sge, %0, %17 : vector<1x256xi32>
    %c240_i32 = arith.constant 240 : i32
    %19 = vector.broadcast %c240_i32 : i32 to vector<1x256xi32>
    %20 = arith.cmpi slt, %0, %19 : vector<1x256xi32>
    %c1_i32_4 = arith.constant 1 : i32
    %21 = vector.broadcast %c1_i32_4 : i32 to vector<1x256xi32>
    %22 = arith.cmpi sge, %16, %21 : vector<1x256xi32>
    %c14_i32 = arith.constant 14 : i32
    %23 = vector.broadcast %c14_i32 : i32 to vector<1x256xi32>
    %24 = arith.cmpi sle, %16, %23 : vector<1x256xi32>
    %cst = arith.constant 1.000000e+00 : f32
    %25 = vector.broadcast %cst : f32 to vector<1x256xf32>
    %cst_5 = arith.constant 0.000000e+00 : f32
    %26 = vector.broadcast %cst_5 : f32 to vector<7x256xf32>
    %27 = tpu.concatenate %25, %26 in 0 : vector<1x256xf32>, vector<7x256xf32> -> vector<8x256xf32>
    %c0 = arith.constant 0 : index
    %c0_6 = arith.constant 0 : index
    %28 = vector.load %arg2[%c0, %c0_6] : memref<24x80xf32, #tpu.memory_space<vmem>>, vector<24x80xf32>
    %c0_7 = arith.constant 0 : index
    %c0_8 = arith.constant 0 : index
    %c0_9 = arith.constant 0 : index
    %29 = vector.load %arg1[%c0_7, %c0_8, %c0_9] : memref<1x8x290xf32, #tpu.memory_space<vmem>>, vector<1x8x290xf32>
    %30 = vector.shape_cast %29 : vector<1x8x290xf32> to vector<8x290xf32>
    %31 = vector.extract_strided_slice %30 {offsets = [0, 0], sizes = [8, 256], strides = [1, 1]} : vector<8x290xf32> to vector<8x256xf32>
    %32 = arith.andi %18, %22 : vector<1x256xi1>
    %cst_10 = arith.constant 0.000000e+00 : f32
    %33 = vector.shape_cast %32 : vector<1x256xi1> to vector<1x256xi1>
    %34 = vector.broadcast %33 : vector<1x256xi1> to vector<8x256xi1>
    %35 = vector.broadcast %cst_10 : f32 to vector<8x256xf32>
    %36 = arith.select %34, %31, %35 : vector<8x256xi1>, vector<8x256xf32>
    %37 = vector.extract_strided_slice %30 {offsets = [0, 1], sizes = [8, 256], strides = [1, 1]} : vector<8x290xf32> to vector<8x256xf32>
    %cst_11 = arith.constant 0.000000e+00 : f32
    %38 = vector.shape_cast %18 : vector<1x256xi1> to vector<1x256xi1>
    %39 = vector.broadcast %38 : vector<1x256xi1> to vector<8x256xi1>
    %40 = vector.broadcast %cst_11 : f32 to vector<8x256xf32>
    %41 = arith.select %39, %37, %40 : vector<8x256xi1>, vector<8x256xf32>
    %42 = vector.extract_strided_slice %30 {offsets = [0, 2], sizes = [8, 256], strides = [1, 1]} : vector<8x290xf32> to vector<8x256xf32>
    %43 = arith.andi %18, %24 : vector<1x256xi1>
    %cst_12 = arith.constant 0.000000e+00 : f32
    %44 = vector.shape_cast %43 : vector<1x256xi1> to vector<1x256xi1>
    %45 = vector.broadcast %44 : vector<1x256xi1> to vector<8x256xi1>
    %46 = vector.broadcast %cst_12 : f32 to vector<8x256xf32>
    %47 = arith.select %45, %42, %46 : vector<8x256xi1>, vector<8x256xf32>
    %48 = vector.extract_strided_slice %30 {offsets = [0, 16], sizes = [8, 256], strides = [1, 1]} : vector<8x290xf32> to vector<8x256xf32>
    %cst_13 = arith.constant 0.000000e+00 : f32
    %49 = vector.shape_cast %22 : vector<1x256xi1> to vector<1x256xi1>
    %50 = vector.broadcast %49 : vector<1x256xi1> to vector<8x256xi1>
    %51 = vector.broadcast %cst_13 : f32 to vector<8x256xf32>
    %52 = arith.select %50, %48, %51 : vector<8x256xi1>, vector<8x256xf32>
    %53 = vector.extract_strided_slice %30 {offsets = [0, 17], sizes = [8, 256], strides = [1, 1]} : vector<8x290xf32> to vector<8x256xf32>
    %54 = vector.extract_strided_slice %30 {offsets = [0, 18], sizes = [8, 256], strides = [1, 1]} : vector<8x290xf32> to vector<8x256xf32>
    %cst_14 = arith.constant 0.000000e+00 : f32
    %55 = vector.shape_cast %24 : vector<1x256xi1> to vector<1x256xi1>
    %56 = vector.broadcast %55 : vector<1x256xi1> to vector<8x256xi1>
    %57 = vector.broadcast %cst_14 : f32 to vector<8x256xf32>
    %58 = arith.select %56, %54, %57 : vector<8x256xi1>, vector<8x256xf32>
    %59 = vector.extract_strided_slice %30 {offsets = [0, 32], sizes = [8, 256], strides = [1, 1]} : vector<8x290xf32> to vector<8x256xf32>
    %60 = arith.andi %20, %22 : vector<1x256xi1>
    %cst_15 = arith.constant 0.000000e+00 : f32
    %61 = vector.shape_cast %60 : vector<1x256xi1> to vector<1x256xi1>
    %62 = vector.broadcast %61 : vector<1x256xi1> to vector<8x256xi1>
    %63 = vector.broadcast %cst_15 : f32 to vector<8x256xf32>
    %64 = arith.select %62, %59, %63 : vector<8x256xi1>, vector<8x256xf32>
    %65 = vector.extract_strided_slice %30 {offsets = [0, 33], sizes = [8, 256], strides = [1, 1]} : vector<8x290xf32> to vector<8x256xf32>
    %cst_16 = arith.constant 0.000000e+00 : f32
    %66 = vector.shape_cast %20 : vector<1x256xi1> to vector<1x256xi1>
    %67 = vector.broadcast %66 : vector<1x256xi1> to vector<8x256xi1>
    %68 = vector.broadcast %cst_16 : f32 to vector<8x256xf32>
    %69 = arith.select %67, %65, %68 : vector<8x256xi1>, vector<8x256xf32>
    %70 = vector.extract_strided_slice %30 {offsets = [0, 34], sizes = [8, 256], strides = [1, 1]} : vector<8x290xf32> to vector<8x256xf32>
    %71 = arith.andi %20, %24 : vector<1x256xi1>
    %cst_17 = arith.constant 0.000000e+00 : f32
    %72 = vector.shape_cast %71 : vector<1x256xi1> to vector<1x256xi1>
    %73 = vector.broadcast %72 : vector<1x256xi1> to vector<8x256xi1>
    %74 = vector.broadcast %cst_17 : f32 to vector<8x256xf32>
    %75 = arith.select %73, %70, %74 : vector<8x256xi1>, vector<8x256xf32>
    %76 = tpu.concatenate %36, %41, %47, %52, %53, %58, %64, %69, %75, %27 in 0 : vector<8x256xf32>, vector<8x256xf32>, vector<8x256xf32>, vector<8x256xf32>, vector<8x256xf32>, vector<8x256xf32>, vector<8x256xf32>, vector<8x256xf32>, vector<8x256xf32>, vector<8x256xf32> -> vector<80x256xf32>
    %cst_18 = arith.constant dense<0.000000e+00> : vector<24x256xf32>
    %77 = tpu.matmul %28, %76, %cst_18 {dimension_numbers = #tpu.dot_dimension_numbers<[1], [0], [0], [1], [0, 0, 1, 1], [], []>} : vector<24x80xf32>, vector<80x256xf32>, vector<24x256xf32> -> vector<24x256xf32>
    %78 = vector.extract_strided_slice %77 {offsets = [0, 0], sizes = [8, 256], strides = [1, 1]} : vector<24x256xf32> to vector<8x256xf32>
    %c0_19 = arith.constant 0 : index
    %c0_20 = arith.constant 0 : index
    %c0_21 = arith.constant 0 : index
    %79 = vector.load %arg3[%c0_19, %c0_20, %c0_21] : memref<1x8x256xf32, #tpu.memory_space<vmem>>, vector<1x8x256xf32>
    %80 = vector.shape_cast %79 : vector<1x8x256xf32> to vector<8x256xf32>
    %81 = vector.shape_cast %78 : vector<8x256xf32> to vector<1x8x256xf32>
    tpu.vector_store %arg3[%c0_19, %c0_20, %c0_21], %81 {strides = array<i32>} : memref<1x8x256xf32, #tpu.memory_space<vmem>>, vector<1x8x256xf32>,
    %82 = vector.extract_strided_slice %77 {offsets = [8, 0], sizes = [16, 256], strides = [1, 1]} : vector<24x256xf32> to vector<16x256xf32>
    %c0_22 = arith.constant 0 : index
    %c0_23 = arith.constant 0 : index
    %c0_24 = arith.constant 0 : index
    %83 = vector.load %arg4[%c0_22, %c0_23, %c0_24] : memref<1x16x256xf32, #tpu.memory_space<vmem>>, vector<1x16x256xf32>
    %84 = vector.shape_cast %83 : vector<1x16x256xf32> to vector<16x256xf32>
    %85 = vector.shape_cast %82 : vector<16x256xf32> to vector<1x16x256xf32>
    tpu.vector_store %arg4[%c0_22, %c0_23, %c0_24], %85 {strides = array<i32>} : memref<1x16x256xf32, #tpu.memory_space<vmem>>, vector<1x16x256xf32>,
    return
  }
  func.func @transform_0(%arg0: i32) -> (i32, i32, i32) {
    %c0_i32 = arith.constant 0 : i32
    %c0_i32_0 = arith.constant 0 : i32
    %c0_i32_1 = arith.constant 0 : i32
    return %arg0, %c0_i32, %c0_i32_0 : i32, i32, i32
  }
  func.func @transform_1(%arg0: i32) -> (i32, i32) {
    %c0_i32 = arith.constant 0 : i32
    %c0_i32_0 = arith.constant 0 : i32
    %c0_i32_1 = arith.constant 0 : i32
    return %c0_i32, %c0_i32_0 : i32, i32
  }
  func.func @transform_2(%arg0: i32) -> (i32, i32, i32) {
    %c0_i32 = arith.constant 0 : i32
    %c0_i32_0 = arith.constant 0 : i32
    %c0_i32_1 = arith.constant 0 : i32
    return %arg0, %c0_i32, %c0_i32_0 : i32, i32, i32
  }
  func.func @transform_3(%arg0: i32) -> (i32, i32, i32) {
    %c0_i32 = arith.constant 0 : i32
    %c0_i32_0 = arith.constant 0 : i32
    %c0_i32_1 = arith.constant 0 : i32
    return %arg0, %c0_i32, %c0_i32_0 : i32, i32, i32
  }
}

</mosaic_0001>

<llo_original>
// kernel: keyvalue_forward.1
$region0: #{keyvalue_forward.1}
  #allocation0 [shape = 'u32[]', space=smem, size = 0x4, offset = 0x4, fixed_abs, tag = 'smem constant byte address 0x4 - core index']
  #allocation1 [shape = 'u32[144,128]{1,0:T(1,128)}', space=vmem, size = 0x12000, scoped, tag = 'internal scratch']
  %s0 = inlined_call_operand.vmem [shape: f32[2,8,290], index: 0, kind: input, shape index: {}]
  %s1 = inlined_call_operand.vmem [shape: f32[24,80], index: 1, kind: input, shape index: {}]
  %s2 = inlined_call_operand.vmem [shape: f32[2,8,256], index: 2, kind: output, shape index: {0}]
  %s3 = inlined_call_operand.vmem [shape: f32[2,16,256], index: 3, kind: output, shape index: {1}]
  %4 = xla_tuple %s2, %s3
  %s5 = sld [smem:[#allocation0]]
  $region49: #{keyvalue_forward.1} parent=0
    _
  %s7 = ssub.s32 1, %s5
  %s8 = scalar_select 0, %s7, %s5
  loop: start=0, step=1, limit=4
  $region2: #{keyvalue_forward.1} parent=0 // loop_pre_header
    _
  $region3: #{keyvalue_forward.1} parent=0 // loop_header
    %s10 = sphi 0, %s14
    %p11 = scmp.ge.s32.totalorder %s10, 4
    %s20 = sphi 0, %s22
    %s23 = sphi 0, %s20
    %s24 = sphi 0, %s23
    %s40 = sphi 0, %s24
    %s44 = sphi 0, %s44
    %s46 = sphi 0, %s44
    %s47 = sphi 0, %s46
    %s61 = sphi 0, %s47
    %s67 = sphi 0, %s69
    %s70 = sphi 0, %s67
    %s71 = sphi 0, %s70
    %s87 = sphi 0, %s71
    %s93 = sphi 0, %s95
    %s96 = sphi 0, %s93
    %s97 = sphi 0, %s96
    %s113 = sphi 0, %s97
  $region4: #{keyvalue_forward.1} parent=0 // loop_header_branch
    %13 = sbr.rel (%p11) target = $region8
  $region5: #{keyvalue_forward.1} parent=0 // loop_body
    %s15 = ssub.s32 %s10, 1
    %s16 = ssub.s32 %s10, 2
    %s17 = sadd.s32 %s10, 1
    %s18 = ssub.s32 %s10, %s17
    %p19 = scmp.eq.s32.totalorder %s18, 0
    %s21 = sadd.s32 %s20, 1
    %s22 = scalar_select %p19, %s20, %s21
    %p25 = pneg %p19
    %p26 = scmp.eq.s32.totalorder %s10, 1
    %p27 = por %p25, %p26
    %p28 = scmp.ne.s32.totalorder %s20, %s23
    %p29 = scmp.eq.s32.totalorder %s10, 0
    %p30 = por %p28, %p29
    %p31 = scmp.ne.s32.totalorder %s20, %s23
    %p32 = scmp.eq.s32.totalorder %s15, 1
    %p33 = por %p31, %p32
    %p34 = scmp.ne.s32.totalorder %s23, %s24
    %p35 = scmp.eq.s32.totalorder %s15, 0
    %p36 = por %p34, %p35
    %p37 = scmp.ne.s32.totalorder %s23, %s24
    %p38 = scmp.eq.s32.totalorder %s16, 1
    %p39 = por %p37, %p38
    %p41 = scmp.ne.s32.totalorder %s24, %s40
    %p42 = scmp.eq.s32.totalorder %s16, 0
    %p43 = por %p41, %p42
    %s45 = sadd.s32 %s44, 1
    %p48 = scmp.eq.s32.totalorder %s10, 1
    %p49 = scmp.ne.s32.totalorder %s44, %s46
    %p50 = scmp.eq.s32.totalorder %s10, 0
    %p51 = por %p49, %p50
    %p52 = scmp.ne.s32.totalorder %s44, %s46
    %p53 = scmp.eq.s32.totalorder %s15, 1
    %p54 = por %p52, %p53
    %p55 = scmp.ne.s32.totalorder %s46, %s47
    %p56 = scmp.eq.s32.totalorder %s15, 0
    %p57 = por %p55, %p56
    %p58 = scmp.ne.s32.totalorder %s46, %s47
    %p59 = scmp.eq.s32.totalorder %s16, 1
    %p60 = por %p58, %p59
    %p62 = scmp.ne.s32.totalorder %s47, %s61
    %p63 = scmp.eq.s32.totalorder %s16, 0
    %p64 = por %p62, %p63
    %s65 = ssub.s32 %s10, %s17
    %p66 = scmp.eq.s32.totalorder %s65, 0
    %s68 = sadd.s32 %s67, 1
    %s69 = scalar_select %p66, %s67, %s68
    %p72 = pneg %p66
    %p73 = scmp.eq.s32.totalorder %s10, 1
    %p74 = por %p72, %p73
    %p75 = scmp.ne.s32.totalorder %s67, %s70
    %p76 = scmp.eq.s32.totalorder %s10, 0
    %p77 = por %p75, %p76
    %p78 = scmp.ne.s32.totalorder %s67, %s70
    %p79 = scmp.eq.s32.totalorder %s15, 1
    %p80 = por %p78, %p79
    %p81 = scmp.ne.s32.totalorder %s70, %s71
    %p82 = scmp.eq.s32.totalorder %s15, 0
    %p83 = por %p81, %p82
    %p84 = scmp.ne.s32.totalorder %s70, %s71
    %p85 = scmp.eq.s32.totalorder %s16, 1
    %p86 = por %p84, %p85
    %p88 = scmp.ne.s32.totalorder %s71, %s87
    %p89 = scmp.eq.s32.totalorder %s16, 0
    %p90 = por %p88, %p89
    %s91 = ssub.s32 %s10, %s17
    %p92 = scmp.eq.s32.totalorder %s91, 0
    %s94 = sadd.s32 %s93, 1
    %s95 = scalar_select %p92, %s93, %s94
    %p98 = pneg %p92
    %p99 = scmp.eq.s32.totalorder %s10, 1
    %p100 = por %p98, %p99
    %p101 = scmp.ne.s32.totalorder %s93, %s96
    %p102 = scmp.eq.s32.totalorder %s10, 0
    %p103 = por %p101, %p102
    %p104 = scmp.ne.s32.totalorder %s93, %s96
    %p105 = scmp.eq.s32.totalorder %s15, 1
    %p106 = por %p104, %p105
    %p107 = scmp.ne.s32.totalorder %s96, %s97
    %p108 = scmp.eq.s32.totalorder %s15, 0
    %p109 = por %p107, %p108
    %p110 = scmp.ne.s32.totalorder %s96, %s97
    %p111 = scmp.eq.s32.totalorder %s16, 1
    %p112 = por %p110, %p111
    %p114 = scmp.ne.s32.totalorder %s97, %s113
    %p115 = scmp.eq.s32.totalorder %s16, 0
    %p116 = por %p114, %p115
    %p117 = scmp.le.s32.totalorder 1, %s10
    %p118 = scmp.lt.s32.totalorder %s10, 3
    %p119 = pnand %p117, %p118
    %p120 = pneg %p119
    // Predicated region
    $region9: #{keyvalue_forward.1} parent=5 // pred_check
      _
    $region10: #{keyvalue_forward.1} parent=5 // pred_check_branch
      %122 = sbr.rel (%p119) target = $region12
    $region11: #{keyvalue_forward.1} parent=5 // pred_region
      %s123 = ssub.s32 %s10, 1
      // Predicated region
      $region13: #{keyvalue_forward.1} parent=11 // pred_check
        %p124 = pneg %p57
      $region14: #{keyvalue_forward.1} parent=11 // pred_check_branch
        %126 = sbr.rel (%p124) target = $region16
      $region15: #{keyvalue_forward.1} parent=11 // pred_region
        _
      $region16: #{keyvalue_forward.1} parent=11 // pred_fallthru
        _
    $region12: #{keyvalue_forward.1} parent=5 // pred_fallthru
      _
    %p127 = scmp.lt.s32.totalorder %s10, 2
    // Predicated region
    $region17: #{keyvalue_forward.1} parent=5 // pred_check
      %p128 = pneg %p127
    $region18: #{keyvalue_forward.1} parent=5 // pred_check_branch
      %130 = sbr.rel (%p128) target = $region20
    $region19: #{keyvalue_forward.1} parent=5 // pred_region
      // Predicated region
      $region21: #{keyvalue_forward.1} parent=19 // pred_check
        %p131 = pneg %p30
      $region22: #{keyvalue_forward.1} parent=19 // pred_check_branch
        %133 = sbr.rel (%p131) target = $region24
      $region23: #{keyvalue_forward.1} parent=19 // pred_region
        %p134 = scmp.lt.s32.totalorder %s10, 1
        %s135 = scalar_select %p134, %s10, 1
        %s136 = smul.addr %s135, 3
        %s137 = smul.addr %s136, 8
        %s138 = scalar_lea.vmem %s0, %s137
      $region24: #{keyvalue_forward.1} parent=19 // pred_fallthru
        _
    $region20: #{keyvalue_forward.1} parent=5 // pred_fallthru
      _
    %p139 = scmp.le.s32.totalorder 1, %s10
    %p140 = scmp.lt.s32.totalorder %s10, 3
    %p141 = pnand %p139, %p140
    %p142 = pneg %p141
    // Predicated region
    $region25: #{keyvalue_forward.1} parent=5 // pred_check
      _
    $region26: #{keyvalue_forward.1} parent=5 // pred_check_branch
      %144 = sbr.rel (%p141) target = $region28
    $region27: #{keyvalue_forward.1} parent=5 // pred_region
      %s145 = ssub.s32 %s10, 1
      %p146 = scmp.lt.s32.totalorder %s15, 1
      %s147 = scalar_select %p146, %s15, 1
      %s148 = smul.addr %s147, 3
      %s149 = smul.addr %s148, 8
      %s150 = scalar_lea.vmem %s0, %s149
      %p151 = pneg %p36
      %p152 = pneg %p33
      %p153 = pneg %p57
      %p154 = pneg %p54
      %p155 = pneg %p83
      %p156 = pneg %p80
      %p157 = scmp.lt.s32.totalorder %s15, 1
      %s158 = scalar_select %p157, %s15, 1
      %s159 = smul.addr %s158, 2
      %s160 = smul.addr %s159, 8
      %s161 = scalar_lea.vmem %s2, %s160
      %p162 = pneg %p109
      %p163 = pneg %p106
      %p164 = scmp.lt.s32.totalorder %s15, 1
      %s165 = scalar_select %p164, %s15, 1
      %s166 = smul.addr %s165, 4
      %s167 = smul.addr %s166, 8
      %s168 = scalar_lea.vmem %s3, %s167
      %p169 = scmp.lt.s32.totalorder %s15, 1
      %s170 = scalar_select %p169, %s15, 1
      %s171 = smul.addr %s170, 3
      %s172 = smul.addr %s171, 8
      %s173 = scalar_lea.vmem %s0, %s172
      %p174 = scmp.lt.s32.totalorder %s15, 1
      %s175 = scalar_select %p174, %s15, 1
      %s176 = smul.addr %s175, 2
      %s177 = smul.addr %s176, 8
      %s178 = scalar_lea.vmem %s2, %s177
      %p179 = scmp.lt.s32.totalorder %s15, 1
      %s180 = scalar_select %p179, %s15, 1
      %s181 = smul.addr %s180, 4
      %s182 = smul.addr %s181, 8
      %s183 = scalar_lea.vmem %s3, %s182
      %v184 = vlaneseq
      %v185 = vand.u32 %v184, 127
      %v186 = vadd.s32 %v185, 128
      %vm187 = vcmp.lt.s32.totalorder %v185, 0
      %v188 = vsub.s32 0, %v185
      %v189 = vsel %vm187, %v188, %v185
      %v190 = vshrl.u32 %v189, 4
      %v191 = vand.u32 %v189, 15
      %v192 = vsub.s32 0, %v191
      %v193 = vsel %vm187, %v192, %v191
      %vm194 = vcmp.lt.s32.totalorder %v186, 0
      %v195 = vsub.s32 0, %v186
      %v196 = vsel %vm194, %v195, %v186
      %v197 = vshrl.u32 %v196, 4
      %v198 = vand.u32 %v196, 15
      %v199 = vsub.s32 0, %v198
      %v200 = vsel %vm194, %v199, %v198
      %vm201 = vcmp.ne.s32.totalorder %v193, 0
      %vm202 = vcmp.ne.s32.totalorder %v200, 0
      %vm203 = vcmp.lt.s32.totalorder %v193, 0
      %vm204 = vcmp.lt.s32.totalorder %v200, 0
      %vm205 = vmand %vm203, %vm201
      %vm206 = vmand %vm204, %vm202
      %v207 = vadd.s32 %v193, 16
      %v208 = vadd.s32 %v200, 16
      %v209 = vsel %vm205, %v207, %v193
      %v210 = vsel %vm206, %v208, %v200
      %vm211 = vcmp.ge.s32.totalorder %v185, 16
      %vm212 = vcmp.ge.s32.totalorder %v186, 16
      %vm213 = vcmp.lt.s32.totalorder %v185, 240
      %vm214 = vcmp.lt.s32.totalorder %v186, 240
      %vm215 = vcmp.ge.s32.totalorder %v209, 1
      %vm216 = vcmp.ge.s32.totalorder %v210, 1
      %vm217 = vcmp.le.s32.totalorder %v209, 14
      %vm218 = vcmp.le.s32.totalorder %v210, 14
      %vm219 = vcmask 1040384
      %v220 = vsel %vm219, 1.0, 0.0
      %v221 = vld [vmem:[%s1] sm:$0xff]
      %v222 = vld [vmem:[%s1 + $0x8] sm:$0xff]
      %v223 = vld [vmem:[%s1 + $0x10] sm:$0xff]
      %v224 = vld [vmem:[%s173] sm:$0xff]
      %v225 = vld [vmem:[%s173 + $0x8] sm:$0xff]
      %v226 = vld [vmem:[%s173 + $0x10] sm:$0xff]
      %vm227 = vmand %vm211, %vm215
      %vm228 = vmand %vm212, %vm216
      %v229 = vsel %vm227, 1, 0
      %v230 = vsel %vm228, 1, 0
      %vm231 = vcmp.eq.s32.totalorder %v229, 1
      %vm232 = vcmp.eq.s32.totalorder %v230, 1
      %v233 = vsel %vm231, %v224, 0.0
      %v234 = vsel %vm232, %v225, 0.0
      %v235 = vsel %vm211, 1, 0
      %v236 = vsel %vm212, 1, 0
      %vm237 = vcmp.eq.s32.totalorder %v235, 1
      %vm238 = vcmp.eq.s32.totalorder %v236, 1
      %242 = vrot.lane.b32.xlu0 %v224, 127
      %v243 = vpop.permute.xlu0 %242
      %244 = vrot.lane.b32.xlu0 %v225, 127
      %v245 = vpop.permute.xlu0 %244
      %246 = vrot.lane.b32.xlu0 %v226, 127
      %v247 = vpop.permute.xlu0 %246
      %vm248 = vcmask 1039360
      %v249 = vsel %vm248, %v243, %v245
      %v250 = vsel %vm248, %v245, %v247
      %v253 = vsel %vm237, %v249, 0.0
      %v254 = vsel %vm238, %v250, 0.0
      %vm255 = vmand %vm211, %vm217
      %vm256 = vmand %vm212, %vm218
      %v257 = vsel %vm255, 1, 0
      %v258 = vsel %vm256, 1, 0
      %vm259 = vcmp.eq.s32.totalorder %v257, 1
      %vm260 = vcmp.eq.s32.totalorder %v258, 1
      %261 = vrot.lane.b32.xlu0 %v224, 126
      %v262 = vpop.permute.xlu0 %261
      %263 = vrot.lane.b32.xlu0 %v225, 126
      %v264 = vpop.permute.xlu0 %263
      %265 = vrot.lane.b32.xlu0 %v226, 126
      %v266 = vpop.permute.xlu0 %265
      %vm267 = vcmask 1031168
      %v268 = vsel %vm267, %v262, %v264
      %v269 = vsel %vm267, %v264, %v266
      %v272 = vsel %vm259, %v268, 0.0
      %v273 = vsel %vm260, %v269, 0.0
      %v274 = vsel %vm215, 1, 0
      %v275 = vsel %vm216, 1, 0
      %vm276 = vcmp.eq.s32.totalorder %v274, 1
      %vm277 = vcmp.eq.s32.totalorder %v275, 1
      %278 = vrot.lane.b32.xlu0 %v224, 112
      %v279 = vpop.permute.xlu0 %278
      %280 = vrot.lane.b32.xlu0 %v225, 112
      %v281 = vpop.permute.xlu0 %280
      %282 = vrot.lane.b32.xlu0 %v226, 112
      %v283 = vpop.permute.xlu0 %282
      %vm284 = vcmask 916480
      %v285 = vsel %vm284, %v279, %v281
      %v286 = vsel %vm284, %v281, %v283
      %v289 = vsel %vm276, %v285, 0.0
      %v290 = vsel %vm277, %v286, 0.0
      %v291 = vsel %vm217, 1, 0
      %v292 = vsel %vm218, 1, 0
      %vm293 = vcmp.eq.s32.totalorder %v291, 1
      %vm294 = vcmp.eq.s32.totalorder %v292, 1
      %295 = vrot.lane.b32.xlu0 %v224, 110
      %v296 = vpop.permute.xlu0 %295
      %297 = vrot.lane.b32.xlu0 %v225, 110
      %v298 = vpop.permute.xlu0 %297
      %299 = vrot.lane.b32.xlu0 %v226, 110
      %v300 = vpop.permute.xlu0 %299
      %vm301 = vcmask 900096
      %v302 = vsel %vm301, %v296, %v298
      %v303 = vsel %vm301, %v298, %v300
      %v306 = vsel %vm293, %v302, 0.0
      %v307 = vsel %vm294, %v303, 0.0
      %vm308 = vmand %vm213, %vm215
      %vm309 = vmand %vm214, %vm216
      %v310 = vsel %vm308, 1, 0
      %v311 = vsel %vm309, 1, 0
      %vm312 = vcmp.eq.s32.totalorder %v310, 1
      %vm313 = vcmp.eq.s32.totalorder %v311, 1
      %314 = vrot.lane.b32.xlu0 %v224, 96
      %v315 = vpop.permute.xlu0 %314
      %316 = vrot.lane.b32.xlu0 %v225, 96
      %v317 = vpop.permute.xlu0 %316
      %318 = vrot.lane.b32.xlu0 %v226, 96
      %v319 = vpop.permute.xlu0 %318
      %vm320 = vcmask 785408
      %v321 = vsel %vm320, %v315, %v317
      %v322 = vsel %vm320, %v317, %v319
      %v325 = vsel %vm312, %v321, 0.0
      %v326 = vsel %vm313, %v322, 0.0
      %v327 = vsel %vm213, 1, 0
      %v328 = vsel %vm214, 1, 0
      %vm329 = vcmp.eq.s32.totalorder %v327, 1
      %vm330 = vcmp.eq.s32.totalorder %v328, 1
      %331 = vrot.lane.b32.xlu0 %v224, 95
      %v332 = vpop.permute.xlu0 %331
      %333 = vrot.lane.b32.xlu0 %v225, 95
      %v334 = vpop.permute.xlu0 %333
      %335 = vrot.lane.b32.xlu0 %v226, 95
      %v336 = vpop.permute.xlu0 %335
      %vm337 = vcmask 777216
      %v338 = vsel %vm337, %v332, %v334
      %v339 = vsel %vm337, %v334, %v336
      %v342 = vsel %vm329, %v338, 0.0
      %v343 = vsel %vm330, %v339, 0.0
      %vm344 = vmand %vm213, %vm217
      %vm345 = vmand %vm214, %vm218
      %v346 = vsel %vm344, 1, 0
      %v347 = vsel %vm345, 1, 0
      %vm348 = vcmp.eq.s32.totalorder %v346, 1
      %vm349 = vcmp.eq.s32.totalorder %v347, 1
      %350 = vrot.lane.b32.xlu0 %v224, 94
      %v351 = vpop.permute.xlu0 %350
      %352 = vrot.lane.b32.xlu0 %v225, 94
      %v353 = vpop.permute.xlu0 %352
      %354 = vrot.lane.b32.xlu0 %v226, 94
      %v355 = vpop.permute.xlu0 %354
      %vm356 = vcmask 769024
      %v357 = vsel %vm356, %v351, %v353
      %v358 = vsel %vm356, %v353, %v355
      %v361 = vsel %vm348, %v357, 0.0
      %v362 = vsel %vm349, %v358, 0.0
      %363 = vrot.lane.b32.xlu0 %v224, 111
      %v364 = vpop.permute.xlu0 %363
      %365 = vrot.lane.b32.xlu0 %v225, 111
      %v366 = vpop.permute.xlu0 %365
      %367 = vrot.lane.b32.xlu0 %v226, 111
      %v368 = vpop.permute.xlu0 %367
      %vm369 = vcmask 908288
      %v370 = vsel %vm369, %v364, %v366
      %v371 = vsel %vm369, %v366, %v368
      %vm374 = vcmask 654336
      %v376 = vsel %vm374, %v221, 0
      %v379 = vsel %vm374, %v222, 0
      %v382 = vsel %vm374, %v223, 0
      %384 = vmatprep.subr.mxu0 0.0
      %385 = vmatpush1.msra.mxu0 0.0
      %386 = vmatprep.subr.mxu0 0.0
      %387 = vmatpush1.msra.mxu0 0.0
      %388 = vmatprep.subr.mxu0 0.0
      %389 = vmatpush1.msra.mxu0 0.0
      %390 = vmatprep.subr.mxu0 0.0
      %391 = vmatpush1.msra.mxu0 0.0
      %392 = vmatprep.subr.mxu0 0.0
      %393 = vmatpush1.msra.mxu0 0.0
      %394 = vmatprep.subr.mxu0 0.0
      %395 = vmatpush1.msra.mxu0 0.0
      %396 = vmatprep.subr.mxu0 %v220
      %397 = vmatpush1.msra.mxu0 %v220
      %398 = vmatprep.subr.mxu0 %v362
      %399 = vmatpush1.msra.mxu0 %v361
      %400 = vmatprep.subr.mxu0 %v343
      %401 = vmatpush1.msra.mxu0 %v342
      %402 = vmatprep.subr.mxu0 %v326
      %403 = vmatpush1.msra.mxu0 %v325
      %404 = vmatprep.subr.mxu0 %v307
      %405 = vmatpush1.msra.mxu0 %v306
      %406 = vmatprep.subr.mxu0 %v371
      %407 = vmatpush1.msra.mxu0 %v370
      %408 = vmatprep.subr.mxu0 %v290
      %409 = vmatpush1.msra.mxu0 %v289
      %410 = vmatprep.subr.mxu0 %v273
      %411 = vmatpush1.msra.mxu0 %v272
      %412 = vmatprep.subr.mxu0 %v254
      %413 = vmatpush1.msra.mxu0 %v253
      %414 = vmatprep.subr.mxu0 %v234
      %415 = vmatpush1.msra.mxu0 %v233
      %416 = vmatprep.subr.mxu0 0.0
      %417 = vmatpush2.msra.mxu0 0.0
      %418 = vmatprep.subr.mxu0 0.0
      %419 = vmatpush2.msra.mxu0 0.0
      %420 = vmatprep.subr.mxu0 0.0
      %421 = vmatpush2.msra.mxu0 0.0
      %422 = vmatprep.subr.mxu0 0.0
      %423 = vmatpush2.msra.mxu0 0.0
      %424 = vmatprep.subr.mxu0 0.0
      %425 = vmatpush2.msra.mxu0 0.0
      %426 = vmatprep.subr.mxu0 0.0
      %427 = vmatpush2.msra.mxu0 0.0
      %428 = vmatprep.subr.mxu0 0.0
      %429 = vmatpush2.msra.mxu0 0.0
      %430 = vmatprep.subr.mxu0 0.0
      %431 = vmatpush2.msra.mxu0 0.0
      %432 = vmatprep.subr.mxu0 0.0
      %433 = vmatpush2.msra.mxu0 0.0
      %434 = vmatprep.subr.mxu0 0.0
      %435 = vmatpush2.msra.mxu0 0.0
      %436 = vmatprep.subr.mxu0 0.0
      %437 = vmatpush2.msra.mxu0 0.0
      %438 = vmatprep.subr.mxu0 0.0
      %439 = vmatpush2.msra.mxu0 0.0
      %440 = vmatprep.subr.mxu0 0.0
      %441 = vmatpush2.msra.mxu0 0.0
      %442 = vmatprep.subr.mxu0 0.0
      %443 = vmatpush2.msra.mxu0 0.0
      %444 = vmatprep.subr.mxu0 0.0
      %445 = vmatpush2.msra.mxu0 0.0
      %446 = vmatprep.subr.mxu0 0.0
      %447 = vmatpush2.msra.mxu0 0.0
      %448 = vmatprep.mubr.f32.mxu0 0.0
      %449 = vmatmul.mubr.f32.gmra.mxu0 %v376
      %v450 = vpop.f32.mrf.mxu0
      %v451 = vadd.f32 0.0, %v450
      %v452 = vpop.f32.mrf.mxu0
      %v453 = vadd.f32 0.0, %v452
      %454 = vmatprep.mubr.f32.mxu0 0.0
      %455 = vmatmul.mubr.f32.gmra.mxu0 %v379
      %v456 = vpop.f32.mrf.mxu0
      %v457 = vadd.f32 0.0, %v456
      %v458 = vpop.f32.mrf.mxu0
      %v459 = vadd.f32 0.0, %v458
      %460 = vmatprep.mubr.f32.mxu0 0.0
      %461 = vmatmul.mubr.f32.gmra.mxu0 %v382
      %v462 = vpop.f32.mrf.mxu0
      %v463 = vadd.f32 0.0, %v462
      %v464 = vpop.f32.mrf.mxu0
      %v465 = vadd.f32 0.0, %v464
      %466 = vdwg.mxu0
      %467 = vst [vmem:[%s178] sm:$0xff] %v451
      %468 = vst [vmem:[%s178 + $0x8] sm:$0xff] %v453
      %469 = vst [vmem:[%s183] sm:$0xff] %v457
      %470 = vst [vmem:[%s183 + $0x8] sm:$0xff] %v459
      %471 = vst [vmem:[%s183 + $0x10] sm:$0xff] %v463
      %472 = vst [vmem:[%s183 + $0x18] sm:$0xff] %v465
      %p473 = scmp.lt.s32.totalorder %s15, 1
      %s474 = scalar_select %p473, %s15, 1
      %s475 = smul.addr %s474, 2
      %s476 = smul.addr %s475, 8
      %s477 = scalar_lea.vmem %s2, %s476
      %p478 = scmp.lt.s32.totalorder %s15, 1
      %s479 = scalar_select %p478, %s15, 1
      %s480 = smul.addr %s479, 4
      %s481 = smul.addr %s480, 8
      %s482 = scalar_lea.vmem %s3, %s481
      // Predicated region
      $region29: #{keyvalue_forward.1} parent=27 // pred_check
        %p483 = pneg %p80
      $region30: #{keyvalue_forward.1} parent=27 // pred_check_branch
        %485 = sbr.rel (%p483) target = $region32
      $region31: #{keyvalue_forward.1} parent=27 // pred_region
        _
      $region32: #{keyvalue_forward.1} parent=27 // pred_fallthru
        _
      // Predicated region
      $region33: #{keyvalue_forward.1} parent=27 // pred_check
        %p486 = pneg %p106
      $region34: #{keyvalue_forward.1} parent=27 // pred_check_branch
        %488 = sbr.rel (%p486) target = $region36
      $region35: #{keyvalue_forward.1} parent=27 // pred_region
        _
      $region36: #{keyvalue_forward.1} parent=27 // pred_fallthru
        _
    $region28: #{keyvalue_forward.1} parent=5 // pred_fallthru
      _
    %p489 = scmp.le.s32.totalorder 2, %s10
    // Predicated region
    $region37: #{keyvalue_forward.1} parent=5 // pred_check
      %p490 = pneg %p489
    $region38: #{keyvalue_forward.1} parent=5 // pred_check_branch
      %492 = sbr.rel (%p490) target = $region40
    $region39: #{keyvalue_forward.1} parent=5 // pred_region
      %s493 = ssub.s32 %s10, 2
      // Predicated region
      $region41: #{keyvalue_forward.1} parent=39 // pred_check
        %p494 = pneg %p86
      $region42: #{keyvalue_forward.1} parent=39 // pred_check_branch
        %496 = sbr.rel (%p494) target = $region44
      $region43: #{keyvalue_forward.1} parent=39 // pred_region
        %p497 = scmp.lt.s32.totalorder %s16, 1
        %s498 = scalar_select %p497, %s16, 1
        %s499 = smul.addr %s498, 2
        %s500 = smul.addr %s499, 8
        %s501 = scalar_lea.vmem %s2, %s500
      $region44: #{keyvalue_forward.1} parent=39 // pred_fallthru
        _
      // Predicated region
      $region45: #{keyvalue_forward.1} parent=39 // pred_check
        %p502 = pneg %p112
      $region46: #{keyvalue_forward.1} parent=39 // pred_check_branch
        %504 = sbr.rel (%p502) target = $region48
      $region47: #{keyvalue_forward.1} parent=39 // pred_region
        %p505 = scmp.lt.s32.totalorder %s16, 1
        %s506 = scalar_select %p505, %s16, 1
        %s507 = smul.addr %s506, 4
        %s508 = smul.addr %s507, 8
        %s509 = scalar_lea.vmem %s3, %s508
      $region48: #{keyvalue_forward.1} parent=39 // pred_fallthru
        _
    $region40: #{keyvalue_forward.1} parent=5 // pred_fallthru
      _
  $region6: #{keyvalue_forward.1} parent=0 // loop_footer
    %s14 = sadd.s32 1, %s10
  $region7: #{keyvalue_forward.1} parent=0 // loop_footer_branch
    %9 = sbr.rel target = $region3
  $region8: #{keyvalue_forward.1} parent=0 // loop_exit
    _

</llo_original>
